<compile_context>
chip_gen: v7x
topology: tpu7x:2x2x1
jax: 0.10.0
libtpu: 0.0.40
codegen_flags: <defaults>
</compile_context>

<pallas_src>
import jax
import jax.numpy as jnp
from jax.experimental import pallas as pl
from jax.experimental.pallas import tpu as pltpu

NEG_SLOPE = 0.01     # nn.LeakyReLU default
IN_EPS = 1e-5        # nn.InstanceNorm3d default eps (affine=False, no running stats)
VMEM_LIMIT = 32 * 1024 * 1024   # explicit, safe on v5e/v6e/v7x (tiles are small)

# ----------------------------------------------------------------------------
# Pallas kernel 1: lane-dense conv matmul  out(Cout, M) = W(Cout, K) @ P(K, M) [+ b]
# ----------------------------------------------------------------------------
_MATMUL_CACHE = {}


def _get_matmul(cout_p, k, tn, grid_n, has_bias):
    key = (cout_p, k, tn, grid_n, has_bias)
    if key in _MATMUL_CACHE:
        return _MATMUL_CACHE[key]

    def kernel_bias(w_ref, p_ref, b_ref, o_ref):
        o_ref[...] = (jnp.dot(w_ref[...], p_ref[...],
                              preferred_element_type=jnp.float32)
                      + b_ref[...])

    def kernel_nobias(w_ref, p_ref, o_ref):
        o_ref[...] = jnp.dot(w_ref[...], p_ref[...],
                             preferred_element_type=jnp.float32)

    in_specs = [pl.BlockSpec((cout_p, k), lambda j: (0, 0)),   # weights stay resident
                pl.BlockSpec((k, tn), lambda j: (0, j))]
    if has_bias:
        in_specs.append(pl.BlockSpec((cout_p, 1), lambda j: (0, 0)))

    fn = pl.pallas_call(
        kernel_bias if has_bias else kernel_nobias,
        out_shape=jax.ShapeDtypeStruct((cout_p, tn * grid_n), jnp.float32),
        grid_spec=pltpu.PrefetchScalarGridSpec(
            num_scalar_prefetch=0,
            grid=(grid_n,),
            in_specs=in_specs,
            out_specs=pl.BlockSpec((cout_p, tn), lambda j: (0, j))),
        compiler_params=pltpu.CompilerParams(
            dimension_semantics=("parallel",),
            vmem_limit_bytes=VMEM_LIMIT),
    )
    _MATMUL_CACHE[key] = jax.jit(fn)
    return _MATMUL_CACHE[key]


def conv_matmul(w2, p2, bias):
    """w2:(Cout,K) bf16, p2:(K,M) bf16, bias:(Cout,) f32 | None -> (Cout,M) f32."""
    cout, k = w2.shape
    _, m = p2.shape
    cout_p = max(8, ((cout + 7) // 8) * 8)        # keep output sublanes dense
    if cout_p != cout:
        w2 = jnp.pad(w2, ((0, cout_p - cout), (0, 0)))
    tn = 512 if m >= 512 else ((m + 127) // 128) * 128   # lane-dense output tile
    mp = ((m + tn - 1) // tn) * tn
    if mp != m:
        p2 = jnp.pad(p2, ((0, 0), (0, mp - m)))
    grid_n = mp // tn
    fn = _get_matmul(cout_p, k, tn, grid_n, bias is not None)
    if bias is not None:
        b2 = jnp.pad(bias.astype(jnp.float32), (0, cout_p - cout)).reshape(cout_p, 1)
        out = fn(w2, p2, b2)
    else:
        out = fn(w2, p2)
    return out[:cout, :m]


# ----------------------------------------------------------------------------
# Pallas kernel 2: InstanceNorm3d (affine=False) with fused LeakyReLU / residual
# ----------------------------------------------------------------------------
_IN_CACHE = {}


def _get_instance_norm(R, S, TR, fuse_lrelu, has_res):
    key = (R, S, TR, fuse_lrelu, has_res)
    if key in _IN_CACHE:
        return _IN_CACHE[key]

    def kernel(*refs):
        o_ref = refs[-1]
        v = refs[0][...]
        mean = jnp.mean(v, axis=1, keepdims=True)
        cent = v - mean
        var = jnp.mean(cent * cent, axis=1, keepdims=True)
        y = cent * jax.lax.rsqrt(var + IN_EPS)
        if has_res:
            y = y + refs[1][...]
        if fuse_lrelu or has_res:
            y = jnp.where(y >= 0, y, NEG_SLOPE * y)
        o_ref[...] = y

    spec = pl.BlockSpec((TR, S), lambda i: (i, 0))
    in_specs = [spec] + ([spec] if has_res else [])
    fn = pl.pallas_call(
        kernel,
        out_shape=jax.ShapeDtypeStruct((R, S), jnp.float32),
        grid_spec=pltpu.PrefetchScalarGridSpec(
            num_scalar_prefetch=0,
            grid=(R // TR,),
            in_specs=in_specs,
            out_specs=spec),
        compiler_params=pltpu.CompilerParams(
            dimension_semantics=("parallel",),
            vmem_limit_bytes=VMEM_LIMIT),
    )
    _IN_CACHE[key] = jax.jit(fn)
    return _IN_CACHE[key]


def instance_norm(x, fuse_lrelu=False, residual=None):
    """InstanceNorm3d over spatial dims; optional fused LeakyReLU or fused
    (residual add + LeakyReLU) epilogue (matches IN -> +identity -> LeakyReLU)."""
    # TODO(synk): for very large volumes a two-pass mean/var split of S would be
    # needed to bound the (TR, S) block; fine at these sizes.
    B, C, D, H, W = x.shape
    R, S = B * C, D * H * W
    TR = 8 if R % 8 == 0 else R
    fn = _get_instance_norm(R, S, TR, bool(fuse_lrelu), residual is not None)
    x2 = x.reshape(R, S).astype(jnp.float32)
    if residual is not None:
        out = fn(x2, residual.reshape(R, S).astype(jnp.float32))
    else:
        out = fn(x2)
    return out.reshape(B, C, D, H, W)


# ----------------------------------------------------------------------------
# Pallas kernel 3: gridded element-wise ops (lrelu / tanh / add+lrelu / sigmoid*mul)
# ----------------------------------------------------------------------------
_EW_CACHE = {}
_EW_LANE = 512


def _get_elementwise(op, rows_p, TR, n_in):
    key = (op, rows_p, TR, n_in)
    if key in _EW_CACHE:
        return _EW_CACHE[key]

    def kernel(*refs):
        o_ref = refs[-1]
        a = refs[0][...]
        if op == 'lrelu':
            y = jnp.where(a >= 0, a, NEG_SLOPE * a)
        elif op == 'tanh':
            y = jnp.tanh(a)
        elif op == 'add_lrelu':
            s = a + refs[1][...]
            y = jnp.where(s >= 0, s, NEG_SLOPE * s)
        elif op == 'sigmoid_mul':
            # sigmoid(w) = 0.5*(tanh(w/2)+1): transcendental on the EUP, no VALU divide.
            y = a * (0.5 * (jnp.tanh(0.5 * refs[1][...]) + 1.0))
        else:
            raise ValueError(op)
        o_ref[...] = y

    spec = pl.BlockSpec((TR, _EW_LANE), lambda i: (i, 0))
    fn = pl.pallas_call(
        kernel,
        out_shape=jax.ShapeDtypeStruct((rows_p, _EW_LANE), jnp.float32),
        grid_spec=pltpu.PrefetchScalarGridSpec(
            num_scalar_prefetch=0,
            grid=(rows_p // TR,),
            in_specs=[spec] * n_in,
            out_specs=spec),
        compiler_params=pltpu.CompilerParams(
            dimension_semantics=("parallel",),
            vmem_limit_bytes=VMEM_LIMIT),
    )
    _EW_CACHE[key] = jax.jit(fn)
    return _EW_CACHE[key]


def _elementwise(op, *args):
    shape = args[0].shape
    total = args[0].size
    rows = -(-total // _EW_LANE)
    TR = 64 if rows >= 64 else 8
    rows_p = -(-rows // TR) * TR
    padded = rows_p * _EW_LANE
    flats = []
    for a in args:
        f = a.reshape(-1).astype(jnp.float32)
        if padded != total:
            f = jnp.pad(f, (0, padded - total))
        flats.append(f.reshape(rows_p, _EW_LANE))
    out = _get_elementwise(op, rows_p, TR, len(args))(*flats)
    return out.reshape(-1)[:total].reshape(shape)


def leaky_relu(x):
    return _elementwise('lrelu', x)


# ----------------------------------------------------------------------------
# Convolution wrappers (im2col glue in JAX, matmul in Pallas)
# ----------------------------------------------------------------------------

def conv3d(x, w, b=None, stride=1, padding=0, dilation=1, pad_mode='zeros'):
    """x:(B,Cin,D,H,W), w:(Cout,Cin,kD,kH,kW) -> (B,Cout,Do,Ho,Wo) f32."""
    Cout, Cin, kd, kh, kw = w.shape
    B, C, D, H, W = x.shape
    assert C == Cin
    x = x.astype(jnp.bfloat16)          # matmul operands bf16, accumulation f32
    if padding > 0:
        mode = {'zeros': 'constant', 'reflect': 'reflect',
                'replicate': 'edge'}[pad_mode]
        x = jnp.pad(x, ((0, 0), (0, 0), (padding, padding),
                        (padding, padding), (padding, padding)), mode=mode)
    Dp, Hp, Wp = x.shape[2], x.shape[3], x.shape[4]
    Do = (Dp - dilation * (kd - 1) - 1) // stride + 1
    Ho = (Hp - dilation * (kh - 1) - 1) // stride + 1
    Wo = (Wp - dilation * (kw - 1) - 1) // stride + 1
    # TODO(synk): im2col patch matrix is still materialized in HBM; fusing the k^3 tap
    # extraction into the Pallas matmul (haloed VMEM tiles + manual DMA) is the next step.
    patches = []
    for a in range(kd):
        for bb in range(kh):
            for c in range(kw):
                start = (0, 0, a * dilation, bb * dilation, c * dilation)
                limit = (B, Cin,
                         a * dilation + (Do - 1) * stride + 1,
                         bb * dilation + (Ho - 1) * stride + 1,
                         c * dilation + (Wo - 1) * stride + 1)
                patches.append(jax.lax.slice(x, start, limit,
                                             (1, 1, stride, stride, stride)))
    p = jnp.stack(patches, axis=2)                       # (B,Cin,k3,Do,Ho,Wo) bf16
    # Lane-dense layout: features (Cin,kd,kh,kw) on the contraction axis,
    # spatial positions on the lane axis (spatial dims stay minor -> cheap transpose).
    p = p.transpose(1, 2, 0, 3, 4, 5).reshape(Cin * kd * kh * kw, B * Do * Ho * Wo)
    w2 = w.reshape(Cout, Cin * kd * kh * kw).astype(jnp.bfloat16)
    out = conv_matmul(w2, p, b)                          # (Cout, B*Do*Ho*Wo) f32
    return out.reshape(Cout, B, Do, Ho, Wo).transpose(1, 0, 2, 3, 4)


def conv_transpose3d(x, w, b, stride, padding):
    """PyTorch ConvTranspose3d, w:(Cin,Cout,k,k,k).

    Sub-pixel decomposition: stride^3 ordinary stride-1 convs on the un-dilated
    input (no zero-stuffing -> ~stride^3 fewer MACs than input-dilation)."""
    Cin, Cout, K, _, _ = w.shape
    B, C, D, H, W = x.shape
    s, p = stride, padding
    O_d = (D - 1) * s - 2 * p + K
    O_h = (H - 1) * s - 2 * p + K
    O_w = (W - 1) * s - 2 * p + K

    def axis_plan(r, I, O):
        k0 = (r + p) % s
        M = len(range(k0, K, s))
        d = (r + p) // s
        O_r = -(-(O - r) // s)
        lo = d - (M - 1)
        hi = (O_r - 1) + d
        return k0, M, O_r, max(0, -lo), max(0, hi - (I - 1)), max(0, lo)

    subs, shapes = [], []
    for rd in range(s):
        k0d, Md, Ord, pld, prd, cld = axis_plan(rd, D, O_d)
        for rh in range(s):
            k0h, Mh, Orh, plh, prh, clh = axis_plan(rh, H, O_h)
            for rw in range(s):
                k0w, Mw, Orw, plw, prw, clw = axis_plan(rw, W, O_w)
                if Md == 0 or Mh == 0 or Mw == 0:
                    subs.append(jnp.zeros((B, Cout, Ord, Orh, Orw), jnp.float32))
                    shapes.append((Ord, Orh, Orw))
                    continue
                wk = w[:, :, k0d::s, k0h::s, k0w::s][:, :, ::-1, ::-1, ::-1]
                wk = jnp.transpose(wk, (1, 0, 2, 3, 4))     # (Cout,Cin,Md,Mh,Mw)
                xp = x[:, :, cld:, clh:, clw:]
                xp = jnp.pad(xp, ((0, 0), (0, 0), (pld, prd), (plh, prh), (plw, prw)))
                y = conv3d(xp, wk, b, stride=1, padding=0)
                subs.append(y[:, :, :Ord, :Orh, :Orw])
                shapes.append((Ord, Orh, Orw))

    if (all(sh == (D, H, W) for sh in shapes)
            and (O_d, O_h, O_w) == (s * D, s * H, s * W)):
        out = jnp.stack(subs, axis=0).reshape(s, s, s, B, Cout, D, H, W)
        out = out.transpose(3, 4, 5, 0, 6, 1, 7, 2).reshape(B, Cout, O_d, O_h, O_w)
    else:
        out = jnp.zeros((B, Cout, O_d, O_h, O_w), jnp.float32)
        i = 0
        for rd in range(s):
            for rh in range(s):
                for rw in range(s):
                    out = out.at[:, :, rd::s, rh::s, rw::s].set(subs[i])
                    i += 1
    return out


def trilinear_resize(x, size):
    """F.interpolate(mode='trilinear', align_corners=True)."""
    # TODO(synk): trilinear resize kept in plain JAX (gather + lerp), not Pallas.
    def lerp_axis(v, n_in, n_out, axis):
        if n_out == n_in:
            return v
        if n_in == 1:
            return jnp.take(v, jnp.zeros((n_out,), jnp.int32), axis=axis)
        scale = (n_in - 1) / (n_out - 1)
        c = jnp.arange(n_out) * scale
        i0 = jnp.clip(jnp.floor(c).astype(jnp.int32), 0, n_in - 1)
        i1 = jnp.clip(i0 + 1, 0, n_in - 1)
        t = (c - i0).astype(v.dtype)
        shp = [1] * v.ndim
        shp[axis] = n_out
        t = t.reshape(shp)
        return jnp.take(v, i0, axis=axis) * (1 - t) + jnp.take(v, i1, axis=axis) * t
    B, C, D, H, W = x.shape
    Do, Ho, Wo = size
    x = lerp_axis(x, D, Do, 2)
    x = lerp_axis(x, H, Ho, 3)
    x = lerp_axis(x, W, Wo, 4)
    return x


# ----------------------------------------------------------------------------
# Parameter construction (deterministic, synthetic); weights stored in bf16
# ----------------------------------------------------------------------------

class ParamGen:
    def __init__(self, seed=0):
        self.key = jax.random.PRNGKey(seed)

    def _next(self):
        self.key, sub = jax.random.split(self.key)
        return sub

    def conv(self, cout, cin, k, bias=True, scale=0.1):
        w = (jax.random.normal(self._next(), (cout, cin, k, k, k), jnp.float32)
             * scale).astype(jnp.bfloat16)
        b = (jax.random.normal(self._next(), (cout,), jnp.float32) * scale
             if bias else None)
        return {'w': w, 'b': b}

    def convT(self, cin, cout, k, scale=0.1):
        w = (jax.random.normal(self._next(), (cin, cout, k, k, k), jnp.float32)
             * scale).astype(jnp.bfloat16)
        b = jax.random.normal(self._next(), (cout,), jnp.float32) * scale
        return {'w': w, 'b': b}


def make_basicblock(pg, inpl, planes, bn=True):
    return {'conv1': pg.conv(planes, inpl, 3, bias=False),
            'conv2': pg.conv(planes, planes, 3, bias=False),
            'skip': (None if bn else pg.conv(planes, inpl, 1, bias=True))}


def basicblock_fwd(p, x):
    identity = x
    out = conv3d(x, p['conv1']['w'], None, stride=1, padding=1, pad_mode='reflect')
    out = instance_norm(out, fuse_lrelu=True)
    out = conv3d(out, p['conv2']['w'], None, stride=1, padding=1, pad_mode='reflect')
    if p['skip'] is None:
        # IN + residual add + LeakyReLU fused in one Pallas pass
        return instance_norm(out, residual=identity)
    identity = conv3d(identity, p['skip']['w'], p['skip']['b'])
    return _elementwise('add_lrelu', out, identity)


def make_bottleneck(pg, inpl, planes, expansion=8):
    return {'conv1': pg.conv(planes, inpl, 1, bias=False),
            'conv2': pg.conv(planes, planes, 3, bias=False),
            'conv3': pg.conv(planes * expansion, planes, 1, bias=False),
            'ds': pg.conv(planes * expansion, inpl, 1, bias=False)}


def bottleneck_fwd(p, x):
    out = conv3d(x, p['conv1']['w'], None)
    out = instance_norm(out, fuse_lrelu=True)
    out = conv3d(out, p['conv2']['w'], None, padding=1, pad_mode='reflect')
    out = instance_norm(out, fuse_lrelu=True)
    out = conv3d(out, p['conv3']['w'], None)
    residual = instance_norm(conv3d(x, p['ds']['w'], None))
    return instance_norm(out, residual=residual)      # IN + add + lrelu fused


def make_fuse_block(pg, in_ch, out_ch):
    exp = out_ch * 2
    return {'expan1': pg.conv(exp, in_ch, 1),
            'expan2': pg.conv(exp, exp, 3),
            'w1': pg.conv(exp // 2, exp, 3),
            'w2': pg.conv(exp, exp // 2, 1),
            'zoom': pg.conv(out_ch, exp, 1),
            'skip': pg.conv(out_ch, in_ch, 1)}


def fuse_block_fwd(p, x_in):
    x = conv3d(x_in, p['expan1']['w'], p['expan1']['b'])
    x = instance_norm(x, fuse_lrelu=True)
    x = conv3d(x, p['expan2']['w'], p['expan2']['b'], padding=1)
    w = conv3d(x, p['w1']['w'], p['w1']['b'], padding=2, dilation=2)
    w = conv3d(w, p['w2']['w'], p['w2']['b'])
    x = _elementwise('sigmoid_mul', x, w)             # x * sigmoid(w) fused
    x = conv3d(x, p['zoom']['w'], p['zoom']['b'])
    skip = conv3d(x_in, p['skip']['w'], p['skip']['b'])
    return x + skip                                   # XLA fuses inside the jit


def make_hr_module(pg, c0, c1):
    return {'b0': [make_basicblock(pg, c0, c0), make_basicblock(pg, c0, c0)],
            'b1': [make_basicblock(pg, c1, c1), make_basicblock(pg, c1, c1)],
            'f01': pg.conv(c0, c1, 1, bias=False),
            'f10': pg.conv(c1, c0, 3, bias=False)}


def hr_module_fwd(p, x0, x1):
    for bp in p['b0']:
        x0 = basicblock_fwd(bp, x0)
    for bp in p['b1']:
        x1 = basicblock_fwd(bp, x1)
    # i = 0 : upsample branch 1 -> branch 0 resolution
    t = instance_norm(conv3d(x1, p['f01']['w'], None))
    t = trilinear_resize(t, x0.shape[2:])
    y0 = _elementwise('add_lrelu', x0, t)
    # i = 1 : downsample branch 0 -> branch 1 resolution (IN + add + lrelu fused)
    t2 = conv3d(x0, p['f10']['w'], None, stride=2, padding=1, pad_mode='reflect')
    y1 = instance_norm(t2, residual=x1)
    return y0, y1


def upsample_fwd(p, x):
    return leaky_relu(conv_transpose3d(x, p['w'], p['b'], 2, 1))


# jitted composites: the HR module compiles once and is dispatched 14 times;
# the others remove per-op dispatch for the repeated blocks.
_HR_FWD = jax.jit(hr_module_fwd)
_BB_FWD = jax.jit(basicblock_fwd)
_BOTTLENECK_FWD = jax.jit(bottleneck_fwd)
_FUSE_FWD = jax.jit(fuse_block_fwd)
_UP_FWD = jax.jit(upsample_fwd)


def make_gnet_params(pg, base):
    b = base
    p = {}
    p['skip_c1'] = pg.conv(b, 1, 3)
    p['skip_c2'] = pg.conv(b, b, 1)
    p['conv1'] = pg.conv(b, b, 3)
    p['conv1_0'] = make_basicblock(pg, b, b)
    p['conv1_1'] = pg.conv(b, b, 3, bias=False)
    p['layer1'] = make_bottleneck(pg, b, b)
    p['t1_0'] = pg.conv(b, 8 * b, 3, bias=False)
    p['t1_1'] = pg.conv(2 * b, 8 * b, 3, bias=False)
    p['stage2'] = [make_hr_module(pg, b, 2 * b) for _ in range(6)]
    p['stage3'] = [make_hr_module(pg, b, 2 * b) for _ in range(8)]
    p['fuse1'] = pg.conv(b, b, 1)
    p['fuse2'] = pg.conv(b, 2 * b, 1)
    p['fuse_layer1'] = pg.conv(b, 2 * b, 3)
    p['fuse_layer2'] = make_fuse_block(pg, 2 * b, b)
    p['fuse_layer3'] = make_fuse_block(pg, 2 * b, b)
    p['up1'] = pg.convT(b, b, 4)
    p['up2'] = pg.convT(b, b, 4)
    p['layer2'] = make_basicblock(pg, b, b)
    p['last_bb1'] = make_basicblock(pg, b, b, bn=True)
    p['last_bb2'] = make_basicblock(pg, b, b, bn=False)
    p['last_conv'] = pg.conv(1, b, 3)
    return p


def gnet_forward(p, x_in):
    # skip_conv
    x = conv3d(x_in, p['skip_c1']['w'], p['skip_c1']['b'], padding=1,
               pad_mode='reflect')
    x = instance_norm(x, fuse_lrelu=True)
    x = conv3d(x, p['skip_c2']['w'], p['skip_c2']['b'])
    skip_x_0 = instance_norm(x)
    # conv1 (stride 2)
    x = conv3d(skip_x_0, p['conv1']['w'], p['conv1']['b'], stride=2, padding=1,
               pad_mode='reflect')
    x = instance_norm(x, fuse_lrelu=True)
    # conv1_0
    skip_x = _BB_FWD(p['conv1_0'], x)
    # conv1_1 (stride 2)
    x = conv3d(x, p['conv1_1']['w'], None, stride=2, padding=1, pad_mode='reflect')
    x = instance_norm(x, fuse_lrelu=True)
    # layer1
    x = _BOTTLENECK_FWD(p['layer1'], x)
    # transition1
    x0 = instance_norm(conv3d(x, p['t1_0']['w'], None, padding=1), fuse_lrelu=True)
    x1 = instance_norm(conv3d(x, p['t1_1']['w'], None, stride=2, padding=1),
                       fuse_lrelu=True)
    # stage2 (transition2 is all-None -> pass-through) and stage3:
    for mp in p['stage2']:
        x0, x1 = _HR_FWD(mp, x0, x1)
    for mp in p['stage3']:
        x0, x1 = _HR_FWD(mp, x0, x1)
    # fuse heads
    x0f = conv3d(x0, p['fuse1']['w'], p['fuse1']['b'])
    x1f = conv3d(x1, p['fuse2']['w'], p['fuse2']['b'])
    x1f = trilinear_resize(x1f, x0f.shape[2:])
    x = jnp.concatenate([x0f, x1f], axis=1)
    x = conv3d(x, p['fuse_layer1']['w'], p['fuse_layer1']['b'], padding=1,
               pad_mode='reflect')
    # upsample 1
    x = _UP_FWD(p['up1'], x)
    x = jnp.concatenate([x, skip_x], axis=1)
    x = _FUSE_FWD(p['fuse_layer2'], x)
    x = _BB_FWD(p['layer2'], x)
    # upsample 2
    x = _UP_FWD(p['up2'], x)
    x = jnp.concatenate([x, skip_x_0], axis=1)
    x = _FUSE_FWD(p['fuse_layer3'], x)
    # last layer
    x = _BB_FWD(p['last_bb1'], x)
    x = _BB_FWD(p['last_bb2'], x)
    x = conv3d(x, p['last_conv']['w'], p['last_conv']['b'], padding=1,
               pad_mode='replicate')
    return _elementwise('tanh', x)


if __name__ == "__main__":
    BASE = 8                      # small "base" (module default 48)
    B, D, H, W = 1, 16, 16, 16    # small volume

    key = jax.random.PRNGKey(0)
    x_in = jax.random.normal(key, (B, 1, D, H, W), jnp.float32)

    pg = ParamGen(seed=0)
    params = make_gnet_params(pg, BASE)

    out = gnet_forward(params, x_in)
    out = jax.block_until_ready(out)

    assert out.shape == (B, 1, D, H, W), out.shape
    assert bool(jnp.all(jnp.isfinite(out)))
    assert bool(jnp.all(jnp.abs(out) <= 1.0 + 1e-6))   # tanh output
    print("KERNEL_OK")
</pallas_src>

<mosaic_0001>
module attributes {stable_mosaic.version = 11 : i64} {
  func.func @kernel_bias(%arg0: i32, %arg1: memref<8x27xbf16, #tpu.memory_space<vmem>>, %arg2: memref<27x512xbf16, #tpu.memory_space<vmem>>, %arg3: memref<8x1xf32, #tpu.memory_space<vmem>>, %arg4: memref<8x512xf32, #tpu.memory_space<vmem>>) attributes {dimension_semantics = [#tpu.dimension_semantics<parallel>], iteration_bounds = array<i64: 8>, scalar_prefetch = 0 : i64, scratch_operands = 0 : i64, tpu.core_type = #tpu.core_type<tc>, window_params = [{pipeline_mode = #tpu.pipeline_mode<synchronous>, transform_indices = @transform_0, window_bounds = array<i64: 8, 27>}, {transform_indices = @transform_1, window_bounds = array<i64: 27, 512>}, {pipeline_mode = #tpu.pipeline_mode<synchronous>, transform_indices = @transform_2, window_bounds = array<i64: 8, 1>}, {transform_indices = @transform_3, window_bounds = array<i64: 8, 512>}]} {
    %c0 = arith.constant 0 : index
    %c0_0 = arith.constant 0 : index
    %0 = vector.load %arg1[%c0, %c0_0] : memref<8x27xbf16, #tpu.memory_space<vmem>>, vector<8x27xbf16>
    %c0_1 = arith.constant 0 : index
    %c0_2 = arith.constant 0 : index
    %1 = vector.load %arg2[%c0_1, %c0_2] : memref<27x512xbf16, #tpu.memory_space<vmem>>, vector<27x512xbf16>
    %cst = arith.constant dense<0.000000e+00> : vector<8x512xf32>
    %2 = tpu.matmul %0, %1, %cst {dimension_numbers = #tpu.dot_dimension_numbers<[1], [0], [0], [1], [0, 0, 1, 1], [], []>} : vector<8x27xbf16>, vector<27x512xbf16>, vector<8x512xf32> -> vector<8x512xf32>
    %c0_3 = arith.constant 0 : index
    %c0_4 = arith.constant 0 : index
    %3 = vector.load %arg3[%c0_3, %c0_4] : memref<8x1xf32, #tpu.memory_space<vmem>>, vector<8x1xf32>
    %4 = vector.broadcast %3 : vector<8x1xf32> to vector<8x512xf32>
    %5 = arith.addf %2, %4 : vector<8x512xf32>
    %c0_5 = arith.constant 0 : index
    %c0_6 = arith.constant 0 : index
    %6 = vector.load %arg4[%c0_5, %c0_6] : memref<8x512xf32, #tpu.memory_space<vmem>>, vector<8x512xf32>
    tpu.vector_store %arg4[%c0_5, %c0_6], %5 {strides = array<i32>} : memref<8x512xf32, #tpu.memory_space<vmem>>, vector<8x512xf32>,
    return
  }
  func.func @transform_0(%arg0: i32) -> (i32, i32) {
    %c0_i32 = arith.constant 0 : i32
    %c0_i32_0 = arith.constant 0 : i32
    %c0_i32_1 = arith.constant 0 : i32
    return %c0_i32, %c0_i32_0 : i32, i32
  }
  func.func @transform_1(%arg0: i32) -> (i32, i32) {
    %c0_i32 = arith.constant 0 : i32
    %c0_i32_0 = arith.constant 0 : i32
    return %c0_i32, %arg0 : i32, i32
  }
  func.func @transform_2(%arg0: i32) -> (i32, i32) {
    %c0_i32 = arith.constant 0 : i32
    %c0_i32_0 = arith.constant 0 : i32
    %c0_i32_1 = arith.constant 0 : i32
    return %c0_i32, %c0_i32_0 : i32, i32
  }
  func.func @transform_3(%arg0: i32) -> (i32, i32) {
    %c0_i32 = arith.constant 0 : i32
    %c0_i32_0 = arith.constant 0 : i32
    return %c0_i32, %arg0 : i32, i32
  }
}

</mosaic_0001>

<llo_original>
// kernel: tpu_custom_call.1
$region0: #{tpu_custom_call.1}
  #allocation0 [shape = 'u32[]', space=smem, size = 0x4, offset = 0x4, fixed_abs, tag = 'smem constant byte address 0x4 - core index']
  #allocation1 [shape = 'u32[144,128]{1,0:T(1,128)}', space=vmem, size = 0x12000, scoped, tag = 'internal scratch']
  %s0 = inlined_call_operand.vmem [shape: bf16[8,27], index: 0, kind: input, shape index: {}]
  %s1 = inlined_call_operand.hbm [shape: bf16[27,4096], index: 1, kind: input, shape index: {}]
  %s2 = inlined_call_operand.vmem [shape: f32[8,1], index: 2, kind: input, shape index: {}]
  %s3 = inlined_call_operand.hbm [shape: f32[8,4096], index: 3, kind: output, shape index: {}]
  %s4 = sld [smem:[#allocation0]]
  $region49: #{tpu_custom_call.1} parent=0
    _
  %s6 = ssub.s32 1, %s4
  %s7 = scalar_select 0, %s6, %s4
  $region1: #{tpu_custom_call.1} parent=0
    #allocation2 [shape = 'u8[65536]{0}', space=vmem, size = 0x10000, scoped, tag = 'input window, operand 1']
    #allocation3 [shape = 's32[2]{0}', space=sflag, size = 0x8, scoped, tag = 'scoped memory for tpu_custom_call.1']
    #allocation4 [shape = 's32[2]{0}', space=sflag, size = 0x8, scoped, tag = 'scoped memory for tpu_custom_call.1']
    #allocation5 [shape = 'u8[32768]{0}', space=vmem, size = 0x8000, scoped, tag = 'output window, operand 0']
    %8 = vsyncpa [#allocation3], 0
    %s9 = scalar_lea.sflag [#allocation3], 1
    %10 = vsyncpa %s9, 0
    %11 = vsyncpa [#allocation4], 0
    %s12 = scalar_lea.sflag [#allocation4], 1
    %13 = vsyncpa %s12, 0
    loop: start=0, step=1, limit=10
    $region2: #{tpu_custom_call.1} parent=1 // loop_pre_header
      _
    $region3: #{tpu_custom_call.1} parent=1 // loop_header
      %s15 = sphi 0, %s19
      %p16 = scmp.ge.s32.totalorder %s15, 10
      %s23 = sphi 0, %s23
      %s25 = sphi 0, %s23
      %s26 = sphi 0, %s25
      %s40 = sphi 0, %s26
      %s46 = sphi 0, %s48
      %s49 = sphi 0, %s46
      %s50 = sphi 0, %s49
      %s66 = sphi 0, %s50
      %s70 = sphi 0, %s70
      %s72 = sphi 0, %s70
      %s73 = sphi 0, %s72
      %s87 = sphi 0, %s73
      %s93 = sphi 0, %s95
      %s96 = sphi 0, %s93
      %s97 = sphi 0, %s96
      %s113 = sphi 0, %s97
    $region4: #{tpu_custom_call.1} parent=1 // loop_header_branch
      %18 = sbr.rel (%p16) target = $region8
    $region5: #{tpu_custom_call.1} parent=1 // loop_body
      %s20 = ssub.s32 %s15, 1
      %s21 = ssub.s32 %s15, 2
      %s22 = sadd.s32 %s15, 1
      %s24 = sadd.s32 %s23, 1
      %p27 = scmp.eq.s32.totalorder %s15, 7
      %p28 = scmp.ne.s32.totalorder %s23, %s25
      %p29 = scmp.eq.s32.totalorder %s15, 0
      %p30 = por %p28, %p29
      %p31 = scmp.ne.s32.totalorder %s23, %s25
      %p32 = scmp.eq.s32.totalorder %s20, 7
      %p33 = por %p31, %p32
      %p34 = scmp.ne.s32.totalorder %s25, %s26
      %p35 = scmp.eq.s32.totalorder %s20, 0
      %p36 = por %p34, %p35
      %p37 = scmp.ne.s32.totalorder %s25, %s26
      %p38 = scmp.eq.s32.totalorder %s21, 7
      %p39 = por %p37, %p38
      %p41 = scmp.ne.s32.totalorder %s26, %s40
      %p42 = scmp.eq.s32.totalorder %s21, 0
      %p43 = por %p41, %p42
      %s44 = ssub.s32 %s15, %s22
      %p45 = scmp.eq.s32.totalorder %s44, 0
      %s47 = sadd.s32 %s46, 1
      %s48 = scalar_select %p45, %s46, %s47
      %p51 = pneg %p45
      %p52 = scmp.eq.s32.totalorder %s15, 7
      %p53 = por %p51, %p52
      %p54 = scmp.ne.s32.totalorder %s46, %s49
      %p55 = scmp.eq.s32.totalorder %s15, 0
      %p56 = por %p54, %p55
      %p57 = scmp.ne.s32.totalorder %s46, %s49
      %p58 = scmp.eq.s32.totalorder %s20, 7
      %p59 = por %p57, %p58
      %p60 = scmp.ne.s32.totalorder %s49, %s50
      %p61 = scmp.eq.s32.totalorder %s20, 0
      %p62 = por %p60, %p61
      %p63 = scmp.ne.s32.totalorder %s49, %s50
      %p64 = scmp.eq.s32.totalorder %s21, 7
      %p65 = por %p63, %p64
      %p67 = scmp.ne.s32.totalorder %s50, %s66
      %p68 = scmp.eq.s32.totalorder %s21, 0
      %p69 = por %p67, %p68
      %s71 = sadd.s32 %s70, 1
      %p74 = scmp.eq.s32.totalorder %s15, 7
      %p75 = scmp.ne.s32.totalorder %s70, %s72
      %p76 = scmp.eq.s32.totalorder %s15, 0
      %p77 = por %p75, %p76
      %p78 = scmp.ne.s32.totalorder %s70, %s72
      %p79 = scmp.eq.s32.totalorder %s20, 7
      %p80 = por %p78, %p79
      %p81 = scmp.ne.s32.totalorder %s72, %s73
      %p82 = scmp.eq.s32.totalorder %s20, 0
      %p83 = por %p81, %p82
      %p84 = scmp.ne.s32.totalorder %s72, %s73
      %p85 = scmp.eq.s32.totalorder %s21, 7
      %p86 = por %p84, %p85
      %p88 = scmp.ne.s32.totalorder %s73, %s87
      %p89 = scmp.eq.s32.totalorder %s21, 0
      %p90 = por %p88, %p89
      %s91 = ssub.s32 %s15, %s22
      %p92 = scmp.eq.s32.totalorder %s91, 0
      %s94 = sadd.s32 %s93, 1
      %s95 = scalar_select %p92, %s93, %s94
      %p98 = pneg %p92
      %p99 = scmp.eq.s32.totalorder %s15, 7
      %p100 = por %p98, %p99
      %p101 = scmp.ne.s32.totalorder %s93, %s96
      %p102 = scmp.eq.s32.totalorder %s15, 0
      %p103 = por %p101, %p102
      %p104 = scmp.ne.s32.totalorder %s93, %s96
      %p105 = scmp.eq.s32.totalorder %s20, 7
      %p106 = por %p104, %p105
      %p107 = scmp.ne.s32.totalorder %s96, %s97
      %p108 = scmp.eq.s32.totalorder %s20, 0
      %p109 = por %p107, %p108
      %p110 = scmp.ne.s32.totalorder %s96, %s97
      %p111 = scmp.eq.s32.totalorder %s21, 7
      %p112 = por %p110, %p111
      %p114 = scmp.ne.s32.totalorder %s97, %s113
      %p115 = scmp.eq.s32.totalorder %s21, 0
      %p116 = por %p114, %p115
      %p117 = scmp.le.s32.totalorder 1, %s15
      %p118 = scmp.lt.s32.totalorder %s15, 9
      %p119 = pnand %p117, %p118
      %p120 = pneg %p119
      // Predicated region
      $region9: #{tpu_custom_call.1} parent=5 // pred_check
        _
      $region10: #{tpu_custom_call.1} parent=5 // pred_check_branch
        %122 = sbr.rel (%p119) target = $region12
      $region11: #{tpu_custom_call.1} parent=5 // pred_region
        %s123 = ssub.s32 %s15, 1
        // Predicated region
        $region13: #{tpu_custom_call.1} parent=11 // pred_check
          %p124 = pneg %p36
        $region14: #{tpu_custom_call.1} parent=11 // pred_check_branch
          %126 = sbr.rel (%p124) target = $region16
        $region15: #{tpu_custom_call.1} parent=11 // pred_region
          _
        $region16: #{tpu_custom_call.1} parent=11 // pred_fallthru
          _
        // Predicated region
        $region17: #{tpu_custom_call.1} parent=11 // pred_check
          %p127 = pneg %p83
        $region18: #{tpu_custom_call.1} parent=11 // pred_check_branch
          %129 = sbr.rel (%p127) target = $region20
        $region19: #{tpu_custom_call.1} parent=11 // pred_region
          _
        $region20: #{tpu_custom_call.1} parent=11 // pred_fallthru
          _
      $region12: #{tpu_custom_call.1} parent=5 // pred_fallthru
        _
      %p130 = scmp.lt.s32.totalorder %s15, 8
      // Predicated region
      $region21: #{tpu_custom_call.1} parent=5 // pred_check
        %p131 = pneg %p130
      $region22: #{tpu_custom_call.1} parent=5 // pred_check_branch
        %133 = sbr.rel (%p131) target = $region24
      $region23: #{tpu_custom_call.1} parent=5 // pred_region
        // Predicated region
        $region25: #{tpu_custom_call.1} parent=23 // pred_check
          %p134 = pneg %p56
        $region26: #{tpu_custom_call.1} parent=23 // pred_check_branch
          %136 = sbr.rel (%p134) target = $region28
        $region27: #{tpu_custom_call.1} parent=23 // pred_region
          %s137 = sand.u32 %s46, 1
          %s138 = scalar_lea.sflag [#allocation3], %s137
          %s139 = sand.u32 %s46, 1
          %s140 = smul.addr %s139, 64
          %s141 = scalar_lea.vmem [#allocation2], %s140
          %s142 = smul.u32 4, %s15
          %s144 = ssub.s32 1024, 1024
          %145 = vsyncadd %s138, %s144
          %s146 = smul.addr %s142, 64
          %s147 = scalar_lea.hbm %s1, %s146
          %s148 = sshll.u32 %s141, 4
          %s149 = int_to_ptr.vmem [resolvable:$true] %s148
          %154 = dma.hbm_to_vmem [thread:$0]  %s147, 1024, %s149, %s138, 2048, 256, 16
        $region28: #{tpu_custom_call.1} parent=23 // pred_fallthru
          _
      $region24: #{tpu_custom_call.1} parent=5 // pred_fallthru
        _
      %p155 = scmp.le.s32.totalorder 1, %s15
      %p156 = scmp.lt.s32.totalorder %s15, 9
      %p157 = pnand %p155, %p156
      %p158 = pneg %p157
      // Predicated region
      $region29: #{tpu_custom_call.1} parent=5 // pred_check
        _
      $region30: #{tpu_custom_call.1} parent=5 // pred_check_branch
        %160 = sbr.rel (%p157) target = $region32
      $region31: #{tpu_custom_call.1} parent=5 // pred_region
        %s161 = ssub.s32 %s15, 1
        %s162 = sand.u32 %s49, 1
        %s163 = scalar_lea.sflag [#allocation3], %s162
        %s164 = sand.u32 %s49, 1
        %s165 = smul.addr %s164, 64
        %s166 = scalar_lea.vmem [#allocation2], %s165
        // Predicated region
        $region33: #{tpu_custom_call.1} parent=31 // pred_check
          %p167 = pneg %p62
        $region34: #{tpu_custom_call.1} parent=31 // pred_check_branch
          %169 = sbr.rel (%p167) target = $region36
        $region35: #{tpu_custom_call.1} parent=31 // pred_region
          %170 = dma.done %s163, 1024
        $region36: #{tpu_custom_call.1} parent=31 // pred_fallthru
          _
        %p171 = pneg %p36
        %p172 = pneg %p33
        %s173 = sand.u32 %s49, 1
        %s174 = scalar_lea.sflag [#allocation3], %s173
        %s175 = sand.u32 %s49, 1
        %s176 = smul.addr %s175, 64
        %s177 = scalar_lea.vmem [#allocation2], %s176
        %p178 = pneg %p62
        %p179 = pneg %p59
        %p180 = pneg %p83
        %p181 = pneg %p80
        %p182 = pneg %p109
        %p183 = pneg %p106
        %s184 = sand.u32 %s96, 1
        %s185 = scalar_lea.sflag [#allocation4], %s184
        %s186 = sand.u32 %s96, 1
        %s187 = smul.addr %s186, 32
        %s188 = scalar_lea.vmem [#allocation5], %s187
        %s189 = smul.u32 4, %s20
        %s190 = smul.u32 4, %s20
        %v192 = vld [vmem:[%s0] sm:$0xf]
        %v193 = vld [vmem:[%s166] sm:$0xff]
        %v194 = vld [vmem:[%s166 + $0x8] sm:$0xff]
        %v195 = vld [vmem:[%s166 + $0x10] sm:$0xff]
        %v196 = vld [vmem:[%s166 + $0x18] sm:$0xff]
        %v197 = vld [vmem:[%s166 + $0x20] sm:$0xff]
        %v198 = vld [vmem:[%s166 + $0x28] sm:$0xff]
        %v199 = vld [vmem:[%s166 + $0x30] sm:$0x33]
        %v200 = vld [vmem:[%s166 + $0x38] sm:$0x33]
        %v201 = vld [vmem:[%s2] sm:$0xff]
        %203 = vset.pattern.permute.xlu0 0
        %204 = vperm.xlu0 %203, %v201
        %v205 = vpop.permute.xlu0 %204
        %v215 = vunpack.c.l.b16 %v193
        %v216 = vunpack.c.h.b16 %v193
        %v217 = vunpack.c.l.b16 %v194
        %v218 = vunpack.c.h.b16 %v194
        %v219 = vunpack.c.l.b16 %v195
        %v220 = vunpack.c.h.b16 %v195
        %v221 = vunpack.c.l.b16 %v196
        %v222 = vunpack.c.h.b16 %v196
        %v223 = vunpack.c.l.b16 %v197
        %v224 = vunpack.c.h.b16 %v197
        %v225 = vunpack.c.l.b16 %v198
        %v226 = vunpack.c.h.b16 %v198
        %v227 = vunpack.c.l.b16 %v199
        %v228 = vunpack.c.h.b16 %v199
        %v229 = vunpack.c.l.b16 %v200
        %v230 = vunpack.c.h.b16 %v200
        %v231 = vpack.c.b16 %v219, %v215
        %v232 = vpack.c.b16 %v220, %v216
        %v233 = vpack.c.b16 %v221, %v217
        %v234 = vpack.c.b16 %v222, %v218
        %v235 = vpack.c.b16 %v227, %v223
        %v236 = vpack.c.b16 %v228, %v224
        %v237 = vpack.c.b16 %v229, %v225
        %v238 = vpack.c.b16 %v230, %v226
        %vm243 = vcmask 220160
        %v245 = vsel %vm243, %v192, 0
        %vm247 = vcmask 1044480
        %vm248 = vcmask 1045504
        %v249 = vsel %vm247, 4294967295, 65535
        %v250 = vsel %vm248, %v249, 0
        %v252 = vand.u32 %v235, %v250
        %v255 = vand.u32 %v236, %v250
        %v258 = vand.u32 %v237, %v250
        %v261 = vand.u32 %v238, %v250
        %263 = vmatprep.subr.bf16.mxu0 %v232
        %264 = vmatpush1.bf16.msra.mxu0 %v231
        %265 = vmatprep.subr.bf16.mxu0 %v255
        %266 = vmatpush1.bf16.msra.mxu0 %v252
        %267 = vmatprep.subr.bf16.mxu0 0
        %268 = vmatpush1.bf16.msra.mxu0 0
        %269 = vmatprep.subr.bf16.mxu0 0
        %270 = vmatpush1.bf16.msra.mxu0 0
        %271 = vmatprep.subr.bf16.mxu0 0
        %272 = vmatpush1.bf16.msra.mxu0 0
        %273 = vmatprep.subr.bf16.mxu0 0
        %274 = vmatpush1.bf16.msra.mxu0 0
        %275 = vmatprep.subr.bf16.mxu0 0
        %276 = vmatpush1.bf16.msra.mxu0 0
        %277 = vmatprep.subr.bf16.mxu0 0
        %278 = vmatpush1.bf16.msra.mxu0 0
        %279 = vmatprep.subr.bf16.mxu0 0
        %280 = vmatpush1.bf16.msra.mxu0 0
        %281 = vmatprep.subr.bf16.mxu0 0
        %282 = vmatpush1.bf16.msra.mxu0 0
        %283 = vmatprep.subr.bf16.mxu0 0
        %284 = vmatpush1.bf16.msra.mxu0 0
        %285 = vmatprep.subr.bf16.mxu0 0
        %286 = vmatpush1.bf16.msra.mxu0 0
        %287 = vmatprep.subr.bf16.mxu0 0
        %288 = vmatpush1.bf16.msra.mxu0 0
        %289 = vmatprep.subr.bf16.mxu0 0
        %290 = vmatpush1.bf16.msra.mxu0 0
        %291 = vmatprep.subr.bf16.mxu0 0
        %292 = vmatpush1.bf16.msra.mxu0 0
        %293 = vmatprep.subr.bf16.mxu0 0
        %294 = vmatpush1.bf16.msra.mxu0 0
        %295 = vmatprep.mubr.bf16.mxu0 0
        %296 = vmatmul.mubr.bf16.gmra.mrb[0].mxu0 %v245
        %v297 = vpop.f32.mrb[0].mxu0
        %v298 = vadd.f32 %v205, %v297
        %v299 = vpop.f32.mrb[0].mxu0
        %v300 = vadd.f32 %v205, %v299
        %v301 = vpop.f32.mrb[0].mxu0
        %v302 = vpop.f32.mrb[0].mxu0
        %303 = vdwg.mxu0
        %304 = vmatprep.subr.bf16.mxu0 %v234
        %305 = vmatpush1.bf16.msra.mxu0 %v233
        %306 = vmatprep.subr.bf16.mxu0 %v261
        %307 = vmatpush1.bf16.msra.mxu0 %v258
        %308 = vmatprep.subr.bf16.mxu0 0
        %309 = vmatpush1.bf16.msra.mxu0 0
        %310 = vmatprep.subr.bf16.mxu0 0
        %311 = vmatpush1.bf16.msra.mxu0 0
        %312 = vmatprep.subr.bf16.mxu0 0
        %313 = vmatpush1.bf16.msra.mxu0 0
        %314 = vmatprep.subr.bf16.mxu0 0
        %315 = vmatpush1.bf16.msra.mxu0 0
        %316 = vmatprep.subr.bf16.mxu0 0
        %317 = vmatpush1.bf16.msra.mxu0 0
        %318 = vmatprep.subr.bf16.mxu0 0
        %319 = vmatpush1.bf16.msra.mxu0 0
        %320 = vmatprep.subr.bf16.mxu0 0
        %321 = vmatpush1.bf16.msra.mxu0 0
        %322 = vmatprep.subr.bf16.mxu0 0
        %323 = vmatpush1.bf16.msra.mxu0 0
        %324 = vmatprep.subr.bf16.mxu0 0
        %325 = vmatpush1.bf16.msra.mxu0 0
        %326 = vmatprep.subr.bf16.mxu0 0
        %327 = vmatpush1.bf16.msra.mxu0 0
        %328 = vmatprep.subr.bf16.mxu0 0
        %329 = vmatpush1.bf16.msra.mxu0 0
        %330 = vmatprep.subr.bf16.mxu0 0
        %331 = vmatpush1.bf16.msra.mxu0 0
        %332 = vmatprep.subr.bf16.mxu0 0
        %333 = vmatpush1.bf16.msra.mxu0 0
        %334 = vmatprep.subr.bf16.mxu0 0
        %335 = vmatpush1.bf16.msra.mxu0 0
        %336 = vmatprep.mubr.bf16.mxu0 0
        %337 = vmatmul.mubr.bf16.gmra.mrb[0].mxu0 %v245
        %v338 = vpop.f32.mrb[0].mxu0
        %v339 = vadd.f32 %v205, %v338
        %v340 = vpop.f32.mrb[0].mxu0
        %v341 = vadd.f32 %v205, %v340
        %v342 = vpop.f32.mrb[0].mxu0
        %v343 = vpop.f32.mrb[0].mxu0
        %344 = vdwg.mxu0
        %345 = vst [vmem:[%s188] sm:$0xff] %v298
        %346 = vst [vmem:[%s188 + $0x8] sm:$0xff] %v300
        %347 = vst [vmem:[%s188 + $0x10] sm:$0xff] %v339
        %348 = vst [vmem:[%s188 + $0x18] sm:$0xff] %v341
        %s349 = sand.u32 %s96, 1
        %s350 = scalar_lea.sflag [#allocation4], %s349
        %s351 = sand.u32 %s96, 1
        %s352 = smul.addr %s351, 32
        %s353 = scalar_lea.vmem [#allocation5], %s352
        // Predicated region
        $region37: #{tpu_custom_call.1} parent=31 // pred_check
          %p354 = pneg %p106
        $region38: #{tpu_custom_call.1} parent=31 // pred_check_branch
          %356 = sbr.rel (%p354) target = $region40
        $region39: #{tpu_custom_call.1} parent=31 // pred_region
          %s357 = smul.u32 4, %s20
          %s359 = ssub.s32 512, 512
          %360 = vsyncadd %s350, %s359
          %s361 = smul.addr %s357, 128
          %s362 = scalar_lea.hbm %s3, %s361
          %s364 = sshll.u32 %s353, 4
          %s365 = int_to_ptr.vmem [resolvable:$true] %s364
          %367 = dma.vmem_to_hbm [thread:$0]  %s365, 512, %s362, %s350
        $region40: #{tpu_custom_call.1} parent=31 // pred_fallthru
          _
      $region32: #{tpu_custom_call.1} parent=5 // pred_fallthru
        _
      %p368 = scmp.le.s32.totalorder 2, %s15
      // Predicated region
      $region41: #{tpu_custom_call.1} parent=5 // pred_check
        %p369 = pneg %p368
      $region42: #{tpu_custom_call.1} parent=5 // pred_check_branch
        %371 = sbr.rel (%p369) target = $region44
      $region43: #{tpu_custom_call.1} parent=5 // pred_region
        %s372 = ssub.s32 %s15, 2
        // Predicated region
        $region45: #{tpu_custom_call.1} parent=43 // pred_check
          %p373 = pneg %p112
        $region46: #{tpu_custom_call.1} parent=43 // pred_check_branch
          %375 = sbr.rel (%p373) target = $region48
        $region47: #{tpu_custom_call.1} parent=43 // pred_region
          %s376 = sand.u32 %s97, 1
          %s377 = scalar_lea.sflag [#allocation4], %s376
          %s378 = sand.u32 %s97, 1
          %s379 = smul.addr %s378, 32
          %s380 = scalar_lea.vmem [#allocation5], %s379
          %381 = dma.done %s377, 512
        $region48: #{tpu_custom_call.1} parent=43 // pred_fallthru
          _
      $region44: #{tpu_custom_call.1} parent=5 // pred_fallthru
        _
    $region6: #{tpu_custom_call.1} parent=1 // loop_footer
      %s19 = sadd.s32 1, %s15
    $region7: #{tpu_custom_call.1} parent=1 // loop_footer_branch
      %14 = sbr.rel target = $region3
    $region8: #{tpu_custom_call.1} parent=1 // loop_exit
      _
    %382 = vsyncpa [#allocation3], 1
    %s383 = scalar_lea.sflag [#allocation3], 1
    %384 = vsyncpa %s383, 1
    %385 = vsyncpa [#allocation4], 1
    %s386 = scalar_lea.sflag [#allocation4], 1
    %387 = vsyncpa %s386, 1

</llo_original>
